<compile_context>
chip_gen: v7x
topology: tpu7x:2x2x1
jax: 0.10.0
libtpu: 0.0.40
codegen_flags: <defaults>
</compile_context>

<pallas_src>
import math
import numpy as np

import jax
import jax.numpy as jnp
from jax.experimental import pallas as pl
from jax.experimental.pallas import tpu as pltpu


# --------------------------------------------------------------------------
# Pallas kernels
# --------------------------------------------------------------------------
def _row_gather_kernel(idx_ref, row_ref, out_ref):
    # idx_ref: SMEM scalar-prefetch indices (consumed by the index_maps only).
    # row_ref: (1, demb) row already gathered from HBM by the Element BlockSpec.
    # out_ref: (1, 1, demb) output block (lane-dense along demb).
    del idx_ref
    out_ref[...] = row_ref[...][:, None, :]


def _full_table_kernel(idx_ref, emb_ref, out_ref):
    # Legacy compatibility path: whole table resident in VMEM, dynamic row slice.
    i = pl.program_id(0)
    row = emb_ref[pl.ds(idx_ref[i], 1), :]            # (1, demb)
    out_ref[...] = row[:, None, :]


# --------------------------------------------------------------------------
# Wrappers around pallas_call
# --------------------------------------------------------------------------
def _legacy_full_table_call(pos_emb, gather_idx):
    """Compatibility fallback only (table held in VMEM). Used if the Element
    gather path is rejected by the installed JAX/Mosaic version."""
    seq_len = int(gather_idx.shape[0])
    max_position, demb = pos_emb.shape
    grid_spec = pltpu.PrefetchScalarGridSpec(
        num_scalar_prefetch=1,
        grid=(seq_len,),
        in_specs=[pl.BlockSpec((max_position, demb), lambda i, idx: (0, 0))],
        out_specs=pl.BlockSpec((1, 1, demb), lambda i, idx: (i, 0, 0)),
    )
    return pl.pallas_call(
        _full_table_kernel,
        out_shape=jax.ShapeDtypeStruct((seq_len, 1, demb), pos_emb.dtype),
        grid_spec=grid_spec,
        compiler_params=pltpu.CompilerParams(
            dimension_semantics=("arbitrary",)),
    )(gather_idx, pos_emb)


def positional_embedding_gather(pos_emb, gather_idx, *, prefetch_depth=3):
    """out[i, 0, :] = pos_emb[gather_idx[i], :]   (table stays in HBM).

    Returns a [seq_len, 1, demb] array; the batch broadcast is done by the
    caller with jnp.broadcast_to (free / fusable).
    """
    seq_len = int(gather_idx.shape[0])
    max_position, demb = pos_emb.shape
    # Clamp: Pallas does not bounds-check the gather DMA source.
    gather_idx = jnp.clip(gather_idx.astype(jnp.int32), 0, max_position - 1)

    def _element_gather_call(pipeline_mode):
        spec_kwargs = {} if pipeline_mode is None else {"pipeline_mode": pipeline_mode}
        grid_spec = pltpu.PrefetchScalarGridSpec(
            num_scalar_prefetch=1,               # gather_idx -> SMEM
            grid=(seq_len,),
            in_specs=[
                # Row gather expressed in the BlockSpec: one (1, demb) row per
                # step is DMA'd from HBM; the table is never VMEM-resident.
                pl.BlockSpec((pl.Element(1), demb),
                             lambda i, idx: (idx[i], 0),
                             **spec_kwargs),
            ],
            # Lane-dense [seq_len, 1, demb] output; no in-kernel batch broadcast.
            out_specs=pl.BlockSpec((1, 1, demb), lambda i, idx: (i, 0, 0)),
        )
        return pl.pallas_call(
            _row_gather_kernel,
            out_shape=jax.ShapeDtypeStruct((seq_len, 1, demb), pos_emb.dtype),
            grid_spec=grid_spec,
            compiler_params=pltpu.CompilerParams(
                # Independent row copies: shard across both TCs on v7x.
                dimension_semantics=("parallel",)),
        )(gather_idx, pos_emb)

    attempts = []
    if prefetch_depth is not None and prefetch_depth > 2:
        # Deeper pipelining hides the per-row random HBM DMA latency.
        attempts.append(lambda: _element_gather_call(pl.Buffered(prefetch_depth)))
    attempts.append(lambda: _element_gather_call(None))
    for attempt in attempts:
        try:
            return attempt()
        except Exception:
            continue
    return _legacy_full_table_call(pos_emb, gather_idx)


# --------------------------------------------------------------------------
# Parameter construction (glue, plain JAX) -- mirrors the PyTorch __init__
# --------------------------------------------------------------------------
def _get_1d_sin_cos(positions, demb):
    inv_freq = 1.0 / (10000.0 ** (jnp.arange(0, demb, 2, dtype=jnp.float32) / demb))
    sinusoid = positions.astype(jnp.float32)[:, None] * inv_freq[None, :]
    return jnp.concatenate([jnp.sin(sinusoid), jnp.cos(sinusoid)], axis=-1)


def _get_1d_sincos_from_grid(demb, pos):
    omega = jnp.arange(demb // 2, dtype=jnp.float32) / (demb / 2.0)
    omega = 1.0 / (10000.0 ** omega)
    out = pos.reshape(-1).astype(jnp.float32)[:, None] * omega[None, :]
    return jnp.concatenate([jnp.sin(out), jnp.cos(out)], axis=1)


def get_2d_sincos_pos_embed(demb, grid_size):
    gh = jnp.arange(grid_size, dtype=jnp.float32)
    gw = jnp.arange(grid_size, dtype=jnp.float32)
    gw, gh = jnp.meshgrid(gw, gh)
    emb_h = _get_1d_sincos_from_grid(demb // 2, gh)
    emb_w = _get_1d_sincos_from_grid(demb // 2, gw)
    return jnp.concatenate([emb_h, emb_w], axis=1)


class PositionalEmbedding:
    def __init__(self, demb, max_position, mode, pe_order, permute_indices=None,
                 has_cls_token=False, prepended=False, pos_type='2D',
                 key=jax.random.PRNGKey(0)):
        self.demb = demb
        self.max_position = max_position
        self.mode = mode
        self.pos_type = pos_type
        self.has_cls_token = has_cls_token
        self.pe_order = pe_order
        self.permute_indices = permute_indices

        if self.pe_order != 'row-major':
            if self.permute_indices is None:
                raise ValueError(
                    f'Permutation indices must be provided for pe_order {self.pe_order}.')
            if self.has_cls_token:
                if prepended:
                    self.permute_indices = [0] + [i + 1 for i in self.permute_indices]
                else:
                    self.permute_indices = list(self.permute_indices) + [len(permute_indices)]

        if self.mode == 'static':
            if self.pos_type == '2D':
                num_tokens = self.max_position - 1 if self.has_cls_token else self.max_position
                grid_size = int(math.sqrt(num_tokens))
                if grid_size * grid_size < num_tokens:
                    grid_size += 1
                pos_emb_2d = get_2d_sincos_pos_embed(self.demb, grid_size)
                if self.has_cls_token:
                    cls_token_emb = jnp.zeros((1, self.demb), jnp.float32)
                    if prepended:
                        pos_emb = jnp.concatenate([cls_token_emb, pos_emb_2d], axis=0)
                    else:
                        pos_emb = jnp.concatenate([pos_emb_2d, cls_token_emb], axis=0)
                else:
                    pos_emb = pos_emb_2d
                self.pos_emb = pos_emb[:self.max_position]
            elif self.pos_type == '1D':
                self.pos_emb = _get_1d_sin_cos(jnp.arange(self.max_position), self.demb)
            else:
                raise ValueError("Invalid pos_type. Choose '1D' or '2D'.")
        elif self.mode == 'learned':
            self.pos_emb = 0.02 * jax.random.normal(
                key, (self.max_position, self.demb), jnp.float32)
        else:
            raise ValueError("Invalid mode. Choose 'static' or 'learned'.")

    def forward(self, pos_seq, bsz=None):
        pos_seq = jnp.asarray(pos_seq)
        if pos_seq.ndim != 1:
            # TODO(synk): higher-dimensional pos_seq (batched index grids) not
            # implemented in the Pallas path; only the 1-D case is exercised.
            raise NotImplementedError("Pallas path supports 1-D pos_seq only.")
        pos_seq = pos_seq.astype(jnp.int32)

        # Compose the position lookup with the ordering permutation once:
        # pos_emb[pos_seq][perm] == pos_emb[pos_seq[perm]].
        if self.pe_order != 'row-major':
            perm = jnp.asarray(self.permute_indices, jnp.int32)
            gather_idx = pos_seq[perm]
        else:
            gather_idx = pos_seq

        out = positional_embedding_gather(self.pos_emb, gather_idx)   # [S, 1, D]
        if bsz is not None:
            # Free / fusable broadcast outside the kernel (no extra HBM writeback).
            out = jnp.broadcast_to(out, (out.shape[0], bsz, self.demb))
        return out

    __call__ = forward


# --------------------------------------------------------------------------
# Demo / correctness check
# --------------------------------------------------------------------------
if __name__ == "__main__":
    key = jax.random.PRNGKey(0)
    k_emb, k_pos = jax.random.split(key)

    demb = 128            # lane-dense output (multiple of 128)
    max_position = 64
    seq_len = 8
    bsz = 2

    # --- config 1: learned embeddings, custom (hilbert-like) ordering -----
    permute_indices = [3, 1, 7, 0, 5, 2, 6, 4]
    mod1 = PositionalEmbedding(demb, max_position, mode='learned',
                               pe_order='custom', permute_indices=permute_indices,
                               pos_type='1D', key=k_emb)
    pos_seq = jax.random.randint(k_pos, (seq_len,), 0, max_position, dtype=jnp.int32)

    out1 = jax.block_until_ready(mod1(pos_seq, bsz=bsz))
    ref1 = mod1.pos_emb[pos_seq][jnp.asarray(permute_indices)]        # [seq, demb]
    ref1 = jnp.broadcast_to(ref1[:, None, :], (seq_len, bsz, demb))
    np.testing.assert_allclose(np.asarray(out1), np.asarray(ref1), rtol=1e-6, atol=1e-6)
    assert out1.shape == (seq_len, bsz, demb)

    # --- config 2: static 1D sinusoidal, row-major, bsz=None --------------
    mod2 = PositionalEmbedding(demb, max_position, mode='static',
                               pe_order='row-major', pos_type='1D')
    out2 = jax.block_until_ready(mod2(pos_seq, bsz=None))
    ref2 = mod2.pos_emb[pos_seq][:, None, :]                          # [seq, 1, demb]
    np.testing.assert_allclose(np.asarray(out2), np.asarray(ref2), rtol=1e-6, atol=1e-6)
    assert out2.shape == (seq_len, 1, demb)

    print("KERNEL_OK")
</pallas_src>

<mosaic_0001>
module attributes {stable_mosaic.version = 11 : i64} {
  func.func @_full_table_kernel(%arg0: i32, %arg1: memref<8xi32, #tpu.memory_space<smem>>, %arg2: memref<64x128xf32, #tpu.memory_space<vmem>>, %arg3: memref<1x1x128xf32, #tpu.memory_space<vmem>>) attributes {dimension_semantics = [#tpu.dimension_semantics<arbitrary>], iteration_bounds = array<i64: 8>, scalar_prefetch = 1 : i64, scratch_operands = 0 : i64, tpu.core_type = #tpu.core_type<tc>, window_params = [{pipeline_mode = #tpu.pipeline_mode<synchronous>, transform_indices = @transform_0, window_bounds = array<i64: 64, 128>}, {transform_indices = @transform_1, window_bounds = array<i64: 1, 1, 128>}]} {
    %0 = arith.index_cast %arg0 : i32 to index
    %1 = memref.load %arg1[%0] : memref<8xi32, #tpu.memory_space<smem>>
    %2 = arith.index_cast %1 : i32 to index
    %c0 = arith.constant 0 : index
    %3 = vector.load %arg2[%2, %c0] : memref<64x128xf32, #tpu.memory_space<vmem>>, vector<1x128xf32>
    %4 = vector.shape_cast %3 : vector<1x128xf32> to vector<1x1x128xf32>
    %c0_0 = arith.constant 0 : index
    %c0_1 = arith.constant 0 : index
    %c0_2 = arith.constant 0 : index
    %5 = vector.load %arg3[%c0_0, %c0_1, %c0_2] : memref<1x1x128xf32, #tpu.memory_space<vmem>>, vector<1x1x128xf32>
    tpu.vector_store %arg3[%c0_0, %c0_1, %c0_2], %4 {strides = array<i32>} : memref<1x1x128xf32, #tpu.memory_space<vmem>>, vector<1x1x128xf32>,
    return
  }
  func.func @transform_0(%arg0: i32, %arg1: memref<8xi32, #tpu.memory_space<smem>>) -> (i32, i32) {
    %c0_i32 = arith.constant 0 : i32
    %c0_i32_0 = arith.constant 0 : i32
    %c0_i32_1 = arith.constant 0 : i32
    return %c0_i32, %c0_i32_0 : i32, i32
  }
  func.func @transform_1(%arg0: i32, %arg1: memref<8xi32, #tpu.memory_space<smem>>) -> (i32, i32, i32) {
    %c0_i32 = arith.constant 0 : i32
    %c0_i32_0 = arith.constant 0 : i32
    %c0_i32_1 = arith.constant 0 : i32
    return %arg0, %c0_i32, %c0_i32_0 : i32, i32, i32
  }
}

</mosaic_0001>

<llo_original>
// kernel: tpu_custom_call.1
$region0: #{tpu_custom_call.1}
  #allocation0 [shape = 'u32[]', space=smem, size = 0x4, offset = 0x4, fixed_abs, tag = 'smem constant byte address 0x4 - core index']
  #allocation1 [shape = 'u32[144,128]{1,0:T(1,128)}', space=vmem, size = 0x12000, scoped, tag = 'internal scratch']
  #allocation2 [shape = 's32[1]{0}', space=sflag, size = 0x4, scoped, tag = 'scoped memory for tpu_custom_call.1']
  #allocation3 [shape = 'u8[512]{0}', space=smem, size = 0x200, scoped, tag = 'prefetched SMEM operand 0']
  %s0 = inlined_call_operand.hbm [shape: s32[8], index: 0, kind: input, shape index: {}]
  %s1 = inlined_call_operand.hbm [shape: f32[64,128], index: 1, kind: input, shape index: {}]
  %s2 = inlined_call_operand.hbm [shape: f32[8,1,128], index: 2, kind: output, shape index: {}]
  %s3 = sld [smem:[#allocation0]]
  $region41: #{tpu_custom_call.1} parent=0
    _
  %s5 = ssub.s32 1, %s3
  %s6 = scalar_select 0, %s5, %s3
  %8 = dma.hbm_to_smem %s0, 16, [#allocation3], [#allocation2]
  %9 = dma.done [#allocation2], 16
  %10 = sfence
  $region1: #{tpu_custom_call.1} parent=0
    #allocation4 [shape = 'u8[32768]{0}', space=vmem, size = 0x8000, scoped, tag = 'input window, operand 1, single buffered']
    #allocation5 [shape = 's32[2]{0}', space=sflag, size = 0x8, scoped, tag = 'scoped memory for tpu_custom_call.1']
    #allocation6 [shape = 's32[2]{0}', space=sflag, size = 0x8, scoped, tag = 'scoped memory for tpu_custom_call.1']
    #allocation7 [shape = 'u8[1024]{0}', space=vmem, size = 0x400, scoped, tag = 'output window, operand 0']
    %11 = vsyncpa [#allocation5], 0
    %12 = vsyncpa [#allocation6], 0
    %s13 = scalar_lea.sflag [#allocation6], 1
    %14 = vsyncpa %s13, 0
    loop: start=0, step=1, limit=10
    $region2: #{tpu_custom_call.1} parent=1 // loop_pre_header
      _
    $region3: #{tpu_custom_call.1} parent=1 // loop_header
      %s16 = sphi 0, %s20
      %p17 = scmp.ge.s32.totalorder %s16, 10
      %s24 = sphi 0, %s24
      %s26 = sphi 0, %s24
      %s27 = sphi 0, %s26
      %s41 = sphi 0, %s27
      %s47 = sphi 0, %s49
      %s50 = sphi 0, %s47
      %s51 = sphi 0, %s50
      %s67 = sphi 0, %s51
    $region4: #{tpu_custom_call.1} parent=1 // loop_header_branch
      %19 = sbr.rel (%p17) target = $region8
    $region5: #{tpu_custom_call.1} parent=1 // loop_body
      %s21 = ssub.s32 %s16, 1
      %s22 = ssub.s32 %s16, 2
      %s23 = sadd.s32 %s16, 1
      %s25 = sadd.s32 %s24, 1
      %p28 = scmp.eq.s32.totalorder %s16, 7
      %p29 = scmp.ne.s32.totalorder %s24, %s26
      %p30 = scmp.eq.s32.totalorder %s16, 0
      %p31 = por %p29, %p30
      %p32 = scmp.ne.s32.totalorder %s24, %s26
      %p33 = scmp.eq.s32.totalorder %s21, 7
      %p34 = por %p32, %p33
      %p35 = scmp.ne.s32.totalorder %s26, %s27
      %p36 = scmp.eq.s32.totalorder %s21, 0
      %p37 = por %p35, %p36
      %p38 = scmp.ne.s32.totalorder %s26, %s27
      %p39 = scmp.eq.s32.totalorder %s22, 7
      %p40 = por %p38, %p39
      %p42 = scmp.ne.s32.totalorder %s27, %s41
      %p43 = scmp.eq.s32.totalorder %s22, 0
      %p44 = por %p42, %p43
      %s45 = ssub.s32 %s16, %s23
      %p46 = scmp.eq.s32.totalorder %s45, 0
      %s48 = sadd.s32 %s47, 1
      %s49 = scalar_select %p46, %s47, %s48
      %p52 = pneg %p46
      %p53 = scmp.eq.s32.totalorder %s16, 7
      %p54 = por %p52, %p53
      %p55 = scmp.ne.s32.totalorder %s47, %s50
      %p56 = scmp.eq.s32.totalorder %s16, 0
      %p57 = por %p55, %p56
      %p58 = scmp.ne.s32.totalorder %s47, %s50
      %p59 = scmp.eq.s32.totalorder %s21, 7
      %p60 = por %p58, %p59
      %p61 = scmp.ne.s32.totalorder %s50, %s51
      %p62 = scmp.eq.s32.totalorder %s21, 0
      %p63 = por %p61, %p62
      %p64 = scmp.ne.s32.totalorder %s50, %s51
      %p65 = scmp.eq.s32.totalorder %s22, 7
      %p66 = por %p64, %p65
      %p68 = scmp.ne.s32.totalorder %s51, %s67
      %p69 = scmp.eq.s32.totalorder %s22, 0
      %p70 = por %p68, %p69
      %p71 = scmp.le.s32.totalorder 1, %s16
      %p72 = scmp.lt.s32.totalorder %s16, 9
      %p73 = pnand %p71, %p72
      %p74 = pneg %p73
      // Predicated region
      $region9: #{tpu_custom_call.1} parent=5 // pred_check
        _
      $region10: #{tpu_custom_call.1} parent=5 // pred_check_branch
        %76 = sbr.rel (%p73) target = $region12
      $region11: #{tpu_custom_call.1} parent=5 // pred_region
        %s77 = ssub.s32 %s16, 1
        // Predicated region
        $region13: #{tpu_custom_call.1} parent=11 // pred_check
          %p78 = pneg %p37
        $region14: #{tpu_custom_call.1} parent=11 // pred_check_branch
          %80 = sbr.rel (%p78) target = $region16
        $region15: #{tpu_custom_call.1} parent=11 // pred_region
          %s82 = ssub.s32 1024, 1024
          %83 = vsyncadd [#allocation5], %s82
          %s84 = sshll.u32 [#allocation4], 4
          %s85 = int_to_ptr.vmem [resolvable:$true] %s84
          %90 = dma.hbm_to_vmem [thread:$0]  %s1, 1024, %s85, [#allocation5], 128, 128, 8
        $region16: #{tpu_custom_call.1} parent=11 // pred_fallthru
          _
      $region12: #{tpu_custom_call.1} parent=5 // pred_fallthru
        _
      %p91 = scmp.lt.s32.totalorder %s16, 8
      // Predicated region
      $region17: #{tpu_custom_call.1} parent=5 // pred_check
        %p92 = pneg %p91
      $region18: #{tpu_custom_call.1} parent=5 // pred_check_branch
        %94 = sbr.rel (%p92) target = $region20
      $region19: #{tpu_custom_call.1} parent=5 // pred_region
        _
      $region20: #{tpu_custom_call.1} parent=5 // pred_fallthru
        _
      %p95 = scmp.le.s32.totalorder 1, %s16
      %p96 = scmp.lt.s32.totalorder %s16, 9
      %p97 = pnand %p95, %p96
      %p98 = pneg %p97
      // Predicated region
      $region21: #{tpu_custom_call.1} parent=5 // pred_check
        _
      $region22: #{tpu_custom_call.1} parent=5 // pred_check_branch
        %100 = sbr.rel (%p97) target = $region24
      $region23: #{tpu_custom_call.1} parent=5 // pred_region
        %s101 = ssub.s32 %s16, 1
        // Predicated region
        $region25: #{tpu_custom_call.1} parent=23 // pred_check
          %p102 = pneg %p37
        $region26: #{tpu_custom_call.1} parent=23 // pred_check_branch
          %104 = sbr.rel (%p102) target = $region28
        $region27: #{tpu_custom_call.1} parent=23 // pred_region
          %105 = dma.done [#allocation5], 1024
        $region28: #{tpu_custom_call.1} parent=23 // pred_fallthru
          _
        %p106 = pneg %p37
        %p107 = pneg %p34
        %p108 = pneg %p63
        %p109 = pneg %p60
        %s110 = sand.u32 %s50, 1
        %s111 = scalar_lea.sflag [#allocation6], %s110
        %s112 = sand.u32 %s50, 1
        %s113 = scalar_lea.vmem [#allocation7], %s112
        %s114 = sld [smem:[#allocation3 + %s21]]
        %s115 = scalar_lea.vmem [#allocation4], %s114
        %v116 = vld [vmem:[%s115] sm:$0x1]
        %117 = vst [vmem:[%s113] sm:$0x1] %v116
        %s118 = sand.u32 %s50, 1
        %s119 = scalar_lea.sflag [#allocation6], %s118
        %s120 = sand.u32 %s50, 1
        %s121 = scalar_lea.vmem [#allocation7], %s120
        // Predicated region
        $region29: #{tpu_custom_call.1} parent=23 // pred_check
          %p122 = pneg %p60
        $region30: #{tpu_custom_call.1} parent=23 // pred_check_branch
          %124 = sbr.rel (%p122) target = $region32
        $region31: #{tpu_custom_call.1} parent=23 // pred_region
          %s126 = ssub.s32 16, 16
          %127 = vsyncadd %s119, %s126
          %s128 = smul.addr %s21, 16
          %s129 = scalar_lea.hbm %s2, %s128
          %s131 = sshll.u32 %s121, 4
          %s132 = int_to_ptr.vmem [resolvable:$true] %s131
          %134 = dma.vmem_to_hbm [thread:$0]  %s132, 16, %s129, %s119
        $region32: #{tpu_custom_call.1} parent=23 // pred_fallthru
          _
      $region24: #{tpu_custom_call.1} parent=5 // pred_fallthru
        _
      %p135 = scmp.le.s32.totalorder 2, %s16
      // Predicated region
      $region33: #{tpu_custom_call.1} parent=5 // pred_check
        %p136 = pneg %p135
      $region34: #{tpu_custom_call.1} parent=5 // pred_check_branch
        %138 = sbr.rel (%p136) target = $region36
      $region35: #{tpu_custom_call.1} parent=5 // pred_region
        %s139 = ssub.s32 %s16, 2
        // Predicated region
        $region37: #{tpu_custom_call.1} parent=35 // pred_check
          %p140 = pneg %p66
        $region38: #{tpu_custom_call.1} parent=35 // pred_check_branch
          %142 = sbr.rel (%p140) target = $region40
        $region39: #{tpu_custom_call.1} parent=35 // pred_region
          %s143 = sand.u32 %s51, 1
          %s144 = scalar_lea.sflag [#allocation6], %s143
          %s145 = sand.u32 %s51, 1
          %s146 = scalar_lea.vmem [#allocation7], %s145
          %147 = dma.done %s144, 16
        $region40: #{tpu_custom_call.1} parent=35 // pred_fallthru
          _
      $region36: #{tpu_custom_call.1} parent=5 // pred_fallthru
        _
    $region6: #{tpu_custom_call.1} parent=1 // loop_footer
      %s20 = sadd.s32 1, %s16
    $region7: #{tpu_custom_call.1} parent=1 // loop_footer_branch
      %15 = sbr.rel target = $region3
    $region8: #{tpu_custom_call.1} parent=1 // loop_exit
      _
    %148 = vsyncpa [#allocation5], 1
    %s149 = scalar_lea.sflag [#allocation5], 1
    %150 = vsyncpa %s149, 1
    %151 = vsyncpa [#allocation6], 1
    %s152 = scalar_lea.sflag [#allocation6], 1
    %153 = vsyncpa %s152, 1

</llo_original>
